<compile_context>
chip_gen: v5e
topology: v5e:2x2
jax: 0.10.0
libtpu: 0.0.40
codegen_flags: <defaults>
</compile_context>

<pallas_src>
import functools

import jax
import jax.numpy as jnp
from jax.experimental import pallas as pl
from jax.experimental.pallas import tpu as pltpu


def _multi_dense_kernel(*refs, num_layers, eps, use_activation):
    """Fused [Linear + Dropout(p=0) + LayerNorm + tanh] x num_layers for one
    row-tile of the batch.

    refs layout: (x_ref, w0_ref, affine0_ref, w1_ref, affine1_ref, ..., o_ref)
    where affine_l = stacked [bias; gamma; beta] with shape (3, Cout_l).
    """
    x_ref = refs[0]
    o_ref = refs[1 + 2 * num_layers]

    h = x_ref[...]                                    # (TB, C0), native dtype
    for l in range(num_layers):
        w_ref = refs[1 + 2 * l]                       # (C_{l}, C_{l+1})
        a_ref = refs[2 + 2 * l]                       # (3, C_{l+1})
        w = w_ref[...]
        aff = a_ref[...].astype(jnp.float32)
        bias, gamma, beta = aff[0:1, :], aff[1:2, :], aff[2:3, :]

        # Linear: MXU matmul in native dtype, f32 accumulate.
        y = jnp.dot(h.astype(w.dtype), w,
                    preferred_element_type=jnp.float32) + bias

        # TODO(synk): training-mode Dropout (rate > 0) would need pltpu.prng_*
        # masking; module default dropout_rate=0.0 -> identity here.

        # LayerNorm over last dim (biased variance, torch.nn.LayerNorm default).
        mean = jnp.mean(y, axis=-1, keepdims=True)
        centered = y - mean
        var = jnp.mean(centered * centered, axis=-1, keepdims=True)
        out = centered * jax.lax.rsqrt(var + eps) * gamma + beta

        if use_activation:
            out = jnp.tanh(out)

        h = out                                       # stays in f32 in VMEM/vregs

    o_ref[...] = h.astype(o_ref.dtype)


def multi_dense_forward(x, params, *, use_activation=True, eps=1e-5,
                        row_tile=None):
    """Run the fused MultiDenseLayer forward in a single pallas_call.

    x:      (B, aux_unit)
    params: list of (w, b, gamma, beta) with w pre-transposed to (Cin, Cout).
    """
    B, Cin = x.shape
    num_layers = len(params)
    Cout_last = params[-1][0].shape[1]

    # Bounded row tile: multi-step pipeline + megacore-splittable grid for big B.
    if row_tile is None:
        row_tile = 256
    row_tile = min(row_tile, B)
    if B > 8:
        row_tile = max(8, (row_tile // 8) * 8)

    n_tiles = -(-B // row_tile)
    B_pad = n_tiles * row_tile
    x_in = x if B_pad == B else jnp.pad(x, ((0, B_pad - B), (0, 0)))

    # Flatten params: per layer pass (w, affine=(bias;gamma;beta)).
    flat_inputs = [x_in]
    in_specs = [pl.BlockSpec((row_tile, Cin), lambda i: (i, 0))]
    for (w, b, gamma, beta) in params:
        c_in, c_out = w.shape
        affine = jnp.stack([b, gamma, beta], axis=0)          # (3, Cout)
        flat_inputs.append(w)
        flat_inputs.append(affine)
        in_specs.append(pl.BlockSpec((c_in, c_out), lambda i: (0, 0)))
        in_specs.append(pl.BlockSpec((3, c_out), lambda i: (0, 0)))

    kernel = functools.partial(_multi_dense_kernel, num_layers=num_layers,
                               eps=eps, use_activation=use_activation)

    out = pl.pallas_call(
        kernel,
        out_shape=jax.ShapeDtypeStruct((B_pad, Cout_last), x.dtype),
        grid_spec=pl.GridSpec(
            grid=(n_tiles,),
            in_specs=in_specs,
            out_specs=pl.BlockSpec((row_tile, Cout_last), lambda i: (i, 0)),
        ),
        compiler_params=pltpu.CompilerParams(
            dimension_semantics=("parallel",),
            vmem_limit_bytes=32 * 1024 * 1024,
        ),
    )(*flat_inputs)

    return out if B_pad == B else out[:B]


def init_multi_dense_params(key, aux_unit, linear_units, dtype=jnp.float32):
    """Parameter init mirroring the module's shapes.

    nn.Linear(c0, c1): weight (c1, c0) -> stored transposed as (c0, c1); bias (c1,)
    nn.LayerNorm(c1):  gamma ones (c1,), beta zeros (c1,)
    """
    params = []
    dims = list(zip([aux_unit] + list(linear_units[:-1]), linear_units))
    for (c0, c1) in dims:
        key, kw, kb = jax.random.split(key, 3)
        bound = 1.0 / (c0 ** 0.5)
        w = jax.random.uniform(kw, (c0, c1), dtype, -bound, bound)
        b = jax.random.uniform(kb, (c1,), dtype, -bound, bound)
        gamma = jnp.ones((c1,), dtype)
        beta = jnp.zeros((c1,), dtype)
        params.append((w, b, gamma, beta))
    return params


def _reference_forward(x, params, *, use_activation=True, eps=1e-5):
    """Plain-JAX reference matching the PyTorch forward (eval mode)."""
    h = x.astype(jnp.float32)
    for (w, b, gamma, beta) in params:
        y = h @ w.astype(jnp.float32) + b.astype(jnp.float32)
        mean = jnp.mean(y, axis=-1, keepdims=True)
        var = jnp.mean((y - mean) ** 2, axis=-1, keepdims=True)
        y = (y - mean) / jnp.sqrt(var + eps)
        y = y * gamma.astype(jnp.float32) + beta.astype(jnp.float32)
        if use_activation:
            y = jnp.tanh(y)
        h = y
    return h.astype(x.dtype)


if __name__ == "__main__":
    key = jax.random.PRNGKey(0)

    # MultiDenseLayer(aux_unit=32, linear_units=[64, 128], activation=nn.Tanh(),
    #                 dropout_rate=0.0)
    aux_unit = 32
    linear_units = [64, 128]
    batch = 8

    key, kx, kp = jax.random.split(key, 3)
    x = jax.random.normal(kx, (batch, aux_unit), jnp.float32)
    params = init_multi_dense_params(kp, aux_unit, linear_units)

    out = multi_dense_forward(x, params, use_activation=True)
    out = jax.block_until_ready(out)

    ref = _reference_forward(x, params, use_activation=True)
    assert out.shape == (batch, linear_units[-1])
    assert jnp.allclose(out, ref, atol=1e-5, rtol=1e-5), "mismatch vs reference"

    print("KERNEL_OK")
</pallas_src>

<mosaic_0001>
module attributes {stable_mosaic.version = 11 : i64} {
  func.func @_multi_dense_kernel(%arg0: i32, %arg1: memref<8x32xf32, #tpu.memory_space<vmem>>, %arg2: memref<32x64xf32, #tpu.memory_space<vmem>>, %arg3: memref<3x64xf32, #tpu.memory_space<vmem>>, %arg4: memref<64x128xf32, #tpu.memory_space<vmem>>, %arg5: memref<3x128xf32, #tpu.memory_space<vmem>>, %arg6: memref<8x128xf32, #tpu.memory_space<vmem>>) attributes {dimension_semantics = [#tpu.dimension_semantics<parallel>], iteration_bounds = array<i64: 1>, scalar_prefetch = 0 : i64, scratch_operands = 0 : i64, tpu.core_type = #tpu.core_type<tc>, window_params = [{transform_indices = @transform_0, window_bounds = array<i64: 8, 32>}, {pipeline_mode = #tpu.pipeline_mode<synchronous>, transform_indices = @transform_1, window_bounds = array<i64: 32, 64>}, {pipeline_mode = #tpu.pipeline_mode<synchronous>, transform_indices = @transform_2, window_bounds = array<i64: 3, 64>}, {pipeline_mode = #tpu.pipeline_mode<synchronous>, transform_indices = @transform_3, window_bounds = array<i64: 64, 128>}, {pipeline_mode = #tpu.pipeline_mode<synchronous>, transform_indices = @transform_4, window_bounds = array<i64: 3, 128>}, {transform_indices = @transform_5, window_bounds = array<i64: 8, 128>}]} {
    %c0 = arith.constant 0 : index
    %c0_0 = arith.constant 0 : index
    %0 = vector.load %arg1[%c0, %c0_0] : memref<8x32xf32, #tpu.memory_space<vmem>>, vector<8x32xf32>
    %c0_1 = arith.constant 0 : index
    %c0_2 = arith.constant 0 : index
    %1 = vector.load %arg2[%c0_1, %c0_2] : memref<32x64xf32, #tpu.memory_space<vmem>>, vector<32x64xf32>
    %c0_3 = arith.constant 0 : index
    %c0_4 = arith.constant 0 : index
    %2 = vector.load %arg3[%c0_3, %c0_4] : memref<3x64xf32, #tpu.memory_space<vmem>>, vector<3x64xf32>
    %3 = vector.extract_strided_slice %2 {offsets = [0, 0], sizes = [1, 64], strides = [1, 1]} : vector<3x64xf32> to vector<1x64xf32>
    %4 = vector.extract_strided_slice %2 {offsets = [1, 0], sizes = [1, 64], strides = [1, 1]} : vector<3x64xf32> to vector<1x64xf32>
    %5 = vector.extract_strided_slice %2 {offsets = [2, 0], sizes = [1, 64], strides = [1, 1]} : vector<3x64xf32> to vector<1x64xf32>
    %cst = arith.constant dense<0.000000e+00> : vector<8x64xf32>
    %6 = tpu.matmul %0, %1, %cst {dimension_numbers = #tpu.dot_dimension_numbers<[1], [0], [0], [1], [0, 0, 1, 1], [], []>} : vector<8x32xf32>, vector<32x64xf32>, vector<8x64xf32> -> vector<8x64xf32>
    %7 = vector.broadcast %3 : vector<1x64xf32> to vector<8x64xf32>
    %8 = arith.addf %6, %7 : vector<8x64xf32>
    %cst_5 = arith.constant dense<0.000000e+00> : vector<8xf32>
    %9 = vector.multi_reduction <add>, %8, %cst_5 [1] : vector<8x64xf32> to vector<8xf32>
    %10 = vector.shape_cast %9 : vector<8xf32> to vector<8x1xf32>
    %cst_6 = arith.constant 6.400000e+01 : f32
    %11 = vector.broadcast %cst_6 : f32 to vector<8x1xf32>
    %12 = arith.divf %10, %11 : vector<8x1xf32>
    %13 = vector.broadcast %12 : vector<8x1xf32> to vector<8x64xf32>
    %14 = arith.subf %8, %13 : vector<8x64xf32>
    %15 = arith.mulf %14, %14 : vector<8x64xf32>
    %cst_7 = arith.constant dense<0.000000e+00> : vector<8xf32>
    %16 = vector.multi_reduction <add>, %15, %cst_7 [1] : vector<8x64xf32> to vector<8xf32>
    %17 = vector.shape_cast %16 : vector<8xf32> to vector<8x1xf32>
    %cst_8 = arith.constant 6.400000e+01 : f32
    %18 = vector.broadcast %cst_8 : f32 to vector<8x1xf32>
    %19 = arith.divf %17, %18 : vector<8x1xf32>
    %cst_9 = arith.constant 9.99999974E-6 : f32
    %20 = vector.broadcast %cst_9 : f32 to vector<8x1xf32>
    %21 = arith.addf %19, %20 : vector<8x1xf32>
    %22 = math.rsqrt %21 : vector<8x1xf32>
    %23 = vector.broadcast %22 : vector<8x1xf32> to vector<8x64xf32>
    %24 = arith.mulf %14, %23 : vector<8x64xf32>
    %25 = vector.broadcast %4 : vector<1x64xf32> to vector<8x64xf32>
    %26 = arith.mulf %24, %25 : vector<8x64xf32>
    %27 = vector.broadcast %5 : vector<1x64xf32> to vector<8x64xf32>
    %28 = arith.addf %26, %27 : vector<8x64xf32>
    %29 = math.tanh %28 : vector<8x64xf32>
    %c0_10 = arith.constant 0 : index
    %c0_11 = arith.constant 0 : index
    %30 = vector.load %arg4[%c0_10, %c0_11] : memref<64x128xf32, #tpu.memory_space<vmem>>, vector<64x128xf32>
    %c0_12 = arith.constant 0 : index
    %c0_13 = arith.constant 0 : index
    %31 = vector.load %arg5[%c0_12, %c0_13] : memref<3x128xf32, #tpu.memory_space<vmem>>, vector<3x128xf32>
    %32 = vector.extract_strided_slice %31 {offsets = [0, 0], sizes = [1, 128], strides = [1, 1]} : vector<3x128xf32> to vector<1x128xf32>
    %33 = vector.extract_strided_slice %31 {offsets = [1, 0], sizes = [1, 128], strides = [1, 1]} : vector<3x128xf32> to vector<1x128xf32>
    %34 = vector.extract_strided_slice %31 {offsets = [2, 0], sizes = [1, 128], strides = [1, 1]} : vector<3x128xf32> to vector<1x128xf32>
    %cst_14 = arith.constant dense<0.000000e+00> : vector<8x128xf32>
    %35 = tpu.matmul %29, %30, %cst_14 {dimension_numbers = #tpu.dot_dimension_numbers<[1], [0], [0], [1], [0, 0, 1, 1], [], []>} : vector<8x64xf32>, vector<64x128xf32>, vector<8x128xf32> -> vector<8x128xf32>
    %36 = vector.broadcast %32 : vector<1x128xf32> to vector<8x128xf32>
    %37 = arith.addf %35, %36 : vector<8x128xf32>
    %cst_15 = arith.constant dense<0.000000e+00> : vector<8xf32>
    %38 = vector.multi_reduction <add>, %37, %cst_15 [1] : vector<8x128xf32> to vector<8xf32>
    %39 = vector.shape_cast %38 : vector<8xf32> to vector<8x1xf32>
    %cst_16 = arith.constant 1.280000e+02 : f32
    %40 = vector.broadcast %cst_16 : f32 to vector<8x1xf32>
    %41 = arith.divf %39, %40 : vector<8x1xf32>
    %42 = vector.broadcast %41 : vector<8x1xf32> to vector<8x128xf32>
    %43 = arith.subf %37, %42 : vector<8x128xf32>
    %44 = arith.mulf %43, %43 : vector<8x128xf32>
    %cst_17 = arith.constant dense<0.000000e+00> : vector<8xf32>
    %45 = vector.multi_reduction <add>, %44, %cst_17 [1] : vector<8x128xf32> to vector<8xf32>
    %46 = vector.shape_cast %45 : vector<8xf32> to vector<8x1xf32>
    %cst_18 = arith.constant 1.280000e+02 : f32
    %47 = vector.broadcast %cst_18 : f32 to vector<8x1xf32>
    %48 = arith.divf %46, %47 : vector<8x1xf32>
    %cst_19 = arith.constant 9.99999974E-6 : f32
    %49 = vector.broadcast %cst_19 : f32 to vector<8x1xf32>
    %50 = arith.addf %48, %49 : vector<8x1xf32>
    %51 = math.rsqrt %50 : vector<8x1xf32>
    %52 = vector.broadcast %51 : vector<8x1xf32> to vector<8x128xf32>
    %53 = arith.mulf %43, %52 : vector<8x128xf32>
    %54 = vector.broadcast %33 : vector<1x128xf32> to vector<8x128xf32>
    %55 = arith.mulf %53, %54 : vector<8x128xf32>
    %56 = vector.broadcast %34 : vector<1x128xf32> to vector<8x128xf32>
    %57 = arith.addf %55, %56 : vector<8x128xf32>
    %58 = math.tanh %57 : vector<8x128xf32>
    %c0_20 = arith.constant 0 : index
    %c0_21 = arith.constant 0 : index
    %59 = vector.load %arg6[%c0_20, %c0_21] : memref<8x128xf32, #tpu.memory_space<vmem>>, vector<8x128xf32>
    tpu.vector_store %arg6[%c0_20, %c0_21], %58 {strides = array<i32>} : memref<8x128xf32, #tpu.memory_space<vmem>>, vector<8x128xf32>,
    return
  }
  func.func @transform_0(%arg0: i32) -> (i32, i32) {
    %c0_i32 = arith.constant 0 : i32
    %c0_i32_0 = arith.constant 0 : i32
    return %arg0, %c0_i32 : i32, i32
  }
  func.func @transform_1(%arg0: i32) -> (i32, i32) {
    %c0_i32 = arith.constant 0 : i32
    %c0_i32_0 = arith.constant 0 : i32
    %c0_i32_1 = arith.constant 0 : i32
    return %c0_i32, %c0_i32_0 : i32, i32
  }
  func.func @transform_2(%arg0: i32) -> (i32, i32) {
    %c0_i32 = arith.constant 0 : i32
    %c0_i32_0 = arith.constant 0 : i32
    %c0_i32_1 = arith.constant 0 : i32
    return %c0_i32, %c0_i32_0 : i32, i32
  }
  func.func @transform_3(%arg0: i32) -> (i32, i32) {
    %c0_i32 = arith.constant 0 : i32
    %c0_i32_0 = arith.constant 0 : i32
    %c0_i32_1 = arith.constant 0 : i32
    return %c0_i32, %c0_i32_0 : i32, i32
  }
  func.func @transform_4(%arg0: i32) -> (i32, i32) {
    %c0_i32 = arith.constant 0 : i32
    %c0_i32_0 = arith.constant 0 : i32
    %c0_i32_1 = arith.constant 0 : i32
    return %c0_i32, %c0_i32_0 : i32, i32
  }
  func.func @transform_5(%arg0: i32) -> (i32, i32) {
    %c0_i32 = arith.constant 0 : i32
    %c0_i32_0 = arith.constant 0 : i32
    return %arg0, %c0_i32 : i32, i32
  }
}

</mosaic_0001>

<llo_original>
// kernel: tpu_custom_call.1
$region0: #{tpu_custom_call.1}
  #allocation0 [shape = 'u32[]', space=smem, size = 0x4, offset = 0x4, fixed_abs, tag = 'smem constant byte address 0x4 - core index']
  #allocation1 [shape = 'u32[72,128]{1,0:T(1,128)}', space=vmem, size = 0x9000, scoped, tag = 'internal scratch']
  %s0 = inlined_call_operand.hbm [shape: f32[8,32], index: 0, kind: input, shape index: {}]
  %s1 = inlined_call_operand.hbm [shape: f32[32,64], index: 1, kind: input, shape index: {}]
  %s2 = inlined_call_operand.hbm [shape: f32[3,64], index: 2, kind: input, shape index: {}]
  %s3 = inlined_call_operand.hbm [shape: f32[64,128], index: 3, kind: input, shape index: {}]
  %s4 = inlined_call_operand.hbm [shape: f32[3,128], index: 4, kind: input, shape index: {}]
  %s5 = inlined_call_operand.hbm [shape: f32[8,128], index: 5, kind: output, shape index: {}]
  %s6 = sld [smem:[#allocation0]]
  $region50: #{tpu_custom_call.1} parent=0
    _
  %s8 = ssub.s32 1, %s6
  %s9 = scalar_select 0, %s8, %s6
  $region1: #{tpu_custom_call.1} parent=0
    #allocation2 [shape = 'u8[4096]{0}', space=vmem, size = 0x1000, scoped, tag = 'input window, operand 0, single buffered']
    #allocation3 [shape = 's32[1]{0}', space=sflag, size = 0x4, scoped, tag = 'scoped memory for tpu_custom_call.1']
    #allocation4 [shape = 's32[1]{0}', space=sflag, size = 0x4, scoped, tag = 'scoped memory for tpu_custom_call.1']
    #allocation5 [shape = 'u8[16384]{0}', space=vmem, size = 0x4000, scoped, tag = 'input window, operand 1, single buffered']
    #allocation6 [shape = 's32[1]{0}', space=sflag, size = 0x4, scoped, tag = 'scoped memory for tpu_custom_call.1']
    #allocation7 [shape = 'u8[2048]{0}', space=vmem, size = 0x800, scoped, tag = 'input window, operand 2, single buffered']
    #allocation8 [shape = 'u8[32768]{0}', space=vmem, size = 0x8000, scoped, tag = 'input window, operand 3, single buffered']
    #allocation9 [shape = 's32[1]{0}', space=sflag, size = 0x4, scoped, tag = 'scoped memory for tpu_custom_call.1']
    #allocation10 [shape = 'u8[2048]{0}', space=vmem, size = 0x800, scoped, tag = 'input window, operand 4, single buffered']
    #allocation11 [shape = 'u8[4096]{0}', space=vmem, size = 0x1000, scoped, tag = 'output window, operand 0, single buffered']
    %10 = vsyncpa [#allocation3], 0
    %11 = vsyncpa [#allocation6], 0
    %12 = vsyncpa [#allocation9], 0
    %13 = vsyncpa [#allocation4], 0
    // Predicated region
    $region2: #{tpu_custom_call.1} parent=1 // pred_check
      _
    $region3: #{tpu_custom_call.1} parent=1 // pred_check_branch
      %15 = sbr.rel (0) target = $region5
    $region4: #{tpu_custom_call.1} parent=1 // pred_region
      %17 = vsyncadd [#allocation3], 0
      %s19 = sshll.u32 %s0, 4
      %s20 = int_to_ptr.hbm [resolvable:$true] %s19
      %s21 = sshll.u32 [#allocation2], 4
      %s22 = int_to_ptr.vmem [resolvable:$true] %s21
      %24 = dma.hbm_to_vmem [thread:$0]  %s20, 128, %s22, [#allocation3]
    $region5: #{tpu_custom_call.1} parent=1 // pred_fallthru
      _
    // Predicated region
    $region6: #{tpu_custom_call.1} parent=1 // pred_check
      _
    $region7: #{tpu_custom_call.1} parent=1 // pred_check_branch
      %26 = sbr.rel (0) target = $region9
    $region8: #{tpu_custom_call.1} parent=1 // pred_region
      %28 = vsyncadd [#allocation6], 0
      %s29 = sshll.u32 %s1, 4
      %s30 = int_to_ptr.hbm [resolvable:$true] %s29
      %s31 = sshll.u32 [#allocation5], 4
      %s32 = int_to_ptr.vmem [resolvable:$true] %s31
      %37 = dma.hbm_to_vmem [thread:$0]  %s30, 512, %s32, [#allocation6], 128, 128, 8
    $region9: #{tpu_custom_call.1} parent=1 // pred_fallthru
      _
    // Predicated region
    $region10: #{tpu_custom_call.1} parent=1 // pred_check
      _
    $region11: #{tpu_custom_call.1} parent=1 // pred_check_branch
      %39 = sbr.rel (0) target = $region13
    $region12: #{tpu_custom_call.1} parent=1 // pred_region
      %41 = vsyncadd [#allocation6], 0
      %s43 = sshll.u32 %s2, 4
      %s44 = int_to_ptr.hbm [resolvable:$true] %s43
      %s45 = sshll.u32 [#allocation7], 4
      %s46 = int_to_ptr.vmem [resolvable:$true] %s45
      %48 = dma.hbm_to_vmem [thread:$0]  %s44, 64, %s46, [#allocation6]
    $region13: #{tpu_custom_call.1} parent=1 // pred_fallthru
      _
    // Predicated region
    $region14: #{tpu_custom_call.1} parent=1 // pred_check
      _
    $region15: #{tpu_custom_call.1} parent=1 // pred_check_branch
      %50 = sbr.rel (0) target = $region17
    $region16: #{tpu_custom_call.1} parent=1 // pred_region
      %52 = vsyncadd [#allocation9], 0
      %s53 = sshll.u32 %s3, 4
      %s54 = int_to_ptr.hbm [resolvable:$true] %s53
      %s55 = sshll.u32 [#allocation8], 4
      %s56 = int_to_ptr.vmem [resolvable:$true] %s55
      %61 = dma.hbm_to_vmem [thread:$0]  %s54, 1024, %s56, [#allocation9], 128, 128, 8
    $region17: #{tpu_custom_call.1} parent=1 // pred_fallthru
      _
    // Predicated region
    $region18: #{tpu_custom_call.1} parent=1 // pred_check
      _
    $region19: #{tpu_custom_call.1} parent=1 // pred_check_branch
      %63 = sbr.rel (0) target = $region21
    $region20: #{tpu_custom_call.1} parent=1 // pred_region
      %65 = vsyncadd [#allocation9], 0
      %s67 = sshll.u32 %s4, 4
      %s68 = int_to_ptr.hbm [resolvable:$true] %s67
      %s69 = sshll.u32 [#allocation10], 4
      %s70 = int_to_ptr.vmem [resolvable:$true] %s69
      %72 = dma.hbm_to_vmem [thread:$0]  %s68, 64, %s70, [#allocation9]
    $region21: #{tpu_custom_call.1} parent=1 // pred_fallthru
      _
    // Predicated region
    $region22: #{tpu_custom_call.1} parent=1 // pred_check
      _
    $region23: #{tpu_custom_call.1} parent=1 // pred_check_branch
      %74 = sbr.rel (0) target = $region25
    $region24: #{tpu_custom_call.1} parent=1 // pred_region
      %76 = dma.done [#allocation3], 128
    $region25: #{tpu_custom_call.1} parent=1 // pred_fallthru
      _
    // Predicated region
    $region26: #{tpu_custom_call.1} parent=1 // pred_check
      _
    $region27: #{tpu_custom_call.1} parent=1 // pred_check_branch
      %78 = sbr.rel (0) target = $region29
    $region28: #{tpu_custom_call.1} parent=1 // pred_region
      %80 = dma.done [#allocation6], 512
    $region29: #{tpu_custom_call.1} parent=1 // pred_fallthru
      _
    // Predicated region
    $region30: #{tpu_custom_call.1} parent=1 // pred_check
      _
    $region31: #{tpu_custom_call.1} parent=1 // pred_check_branch
      %82 = sbr.rel (0) target = $region33
    $region32: #{tpu_custom_call.1} parent=1 // pred_region
      %84 = dma.done [#allocation6], 64
    $region33: #{tpu_custom_call.1} parent=1 // pred_fallthru
      _
    // Predicated region
    $region34: #{tpu_custom_call.1} parent=1 // pred_check
      _
    $region35: #{tpu_custom_call.1} parent=1 // pred_check_branch
      %86 = sbr.rel (0) target = $region37
    $region36: #{tpu_custom_call.1} parent=1 // pred_region
      %88 = dma.done [#allocation9], 1024
    $region37: #{tpu_custom_call.1} parent=1 // pred_fallthru
      _
    // Predicated region
    $region38: #{tpu_custom_call.1} parent=1 // pred_check
      _
    $region39: #{tpu_custom_call.1} parent=1 // pred_check_branch
      %90 = sbr.rel (0) target = $region41
    $region40: #{tpu_custom_call.1} parent=1 // pred_region
      %92 = dma.done [#allocation9], 64
    $region41: #{tpu_custom_call.1} parent=1 // pred_fallthru
      _
    %v93 = vld [vmem:[#allocation2] sm:$0xff]
    %v94 = vld [vmem:[#allocation5] sm:$0xff]
    %v95 = vld [vmem:[#allocation5 + $0x8] sm:$0xff]
    %v96 = vld [vmem:[#allocation5 + $0x10] sm:$0xff]
    %v97 = vld [vmem:[#allocation5 + $0x18] sm:$0xff]
    %v98 = vld [vmem:[#allocation7] sm:$0x7]
    %v99 = vperm.slane %v98, 0
    %vm100 = vcmask 261120
    %v102 = vsel %vm100, %v93, 0
    %104 = vmatpush.msra.mxu0 0.0
    %105 = vmatpush.msra.mxu0 0.0
    %106 = vmatpush.msra.mxu0 0.0
    %107 = vmatpush.msra.mxu0 0.0
    %108 = vmatpush.msra.mxu0 0.0
    %109 = vmatpush.msra.mxu0 0.0
    %110 = vmatpush.msra.mxu0 0.0
    %111 = vmatpush.msra.mxu0 0.0
    %112 = vmatpush.msra.mxu0 0.0
    %113 = vmatpush.msra.mxu0 0.0
    %114 = vmatpush.msra.mxu0 0.0
    %115 = vmatpush.msra.mxu0 0.0
    %116 = vmatpush.msra.mxu0 %v97
    %117 = vmatpush.msra.mxu0 %v96
    %118 = vmatpush.msra.mxu0 %v95
    %119 = vmatpush.msra.mxu0 %v94
    %120 = vmatmul.f32.gmra.mxu0 %v102
    %v121 = vpop.f32.mrf.mxu0
    %v122 = vadd.f32 %v99, %v121
    %123 = vdwg.mxu0
    %vm124 = vcmask 523264
    %v125 = vsel %vm124, %v122, 0.0
    %126 = vadd.xlane.f32.xlu0 %v125
    %v127 = vpop.xlane.xlu0 %126
    %v128 = vrcp.pop 64.0
    %v129 = vmul.f32 64.0, %v128
    %v130 = vsub.f32 1.0, %v129
    %v131 = vmul.f32 %v128, %v130
    %v132 = vadd.f32 %v128, %v131
    %vm133 = vweird.f32 %v128
    %v134 = vsel %vm133, %v128, %v132
    %v135 = vmul.f32 %v127, %v134
    %v136 = vsub.f32 %v122, %v135
    %v137 = vmul.f32 %v136, %v136
    %v138 = vsel %vm124, %v137, 0.0
    %139 = vadd.xlane.f32.xlu0 %v138
    %v140 = vpop.xlane.xlu0 %139
    %v141 = vmul.f32 %v140, %v134
    %v142 = vadd.f32 %v141, 1e-05
    %v143 = vrsqrt.pop %v142
    %v144 = vmul.f32 %v143, %v142
    %v145 = vmul.f32 %v144, %v143
    %v146 = vmul.f32 0.5, %v145
    %v147 = vsub.f32 1.5, %v146
    %v148 = vmul.f32 %v143, %v147
    %vm149 = vweird.f32 %v142
    %vm150 = vweird.f32 %v143
    %vm151 = vmor %vm149, %vm150
    %v152 = vsel %vm151, %v143, %v148
    %v153 = vmul.f32 %v136, %v152
    %v154 = vperm.slane %v98, 1
    %v155 = vmul.f32 %v153, %v154
    %v156 = vperm.slane %v98, 2
    %v157 = vadd.f32 %v155, %v156
    %v158 = vtanh.pop %v157
    %v159 = vld [vmem:[#allocation8] sm:$0xff]
    %v160 = vld [vmem:[#allocation8 + $0x8] sm:$0xff]
    %v161 = vld [vmem:[#allocation8 + $0x10] sm:$0xff]
    %v162 = vld [vmem:[#allocation8 + $0x18] sm:$0xff]
    %v163 = vld [vmem:[#allocation8 + $0x20] sm:$0xff]
    %v164 = vld [vmem:[#allocation8 + $0x28] sm:$0xff]
    %v165 = vld [vmem:[#allocation8 + $0x30] sm:$0xff]
    %v166 = vld [vmem:[#allocation8 + $0x38] sm:$0xff]
    %v167 = vld [vmem:[#allocation10] sm:$0x7]
    %v168 = vperm.slane %v167, 0
    %v170 = vsel %vm124, %v158, 0
    %172 = vmatpush.msra.mxu0 0.0
    %173 = vmatpush.msra.mxu0 0.0
    %174 = vmatpush.msra.mxu0 0.0
    %175 = vmatpush.msra.mxu0 0.0
    %176 = vmatpush.msra.mxu0 0.0
    %177 = vmatpush.msra.mxu0 0.0
    %178 = vmatpush.msra.mxu0 0.0
    %179 = vmatpush.msra.mxu0 0.0
    %180 = vmatpush.msra.mxu0 %v166
    %181 = vmatpush.msra.mxu0 %v165
    %182 = vmatpush.msra.mxu0 %v164
    %183 = vmatpush.msra.mxu0 %v163
    %184 = vmatpush.msra.mxu0 %v162
    %185 = vmatpush.msra.mxu0 %v161
    %186 = vmatpush.msra.mxu0 %v160
    %187 = vmatpush.msra.mxu0 %v159
    %188 = vmatmul.f32.gmra.mxu0 %v170
    %v189 = vpop.f32.mrf.mxu0
    %v190 = vadd.f32 %v168, %v189
    %191 = vdwg.mxu0
    %192 = vadd.xlane.f32.xlu0 %v190
    %v193 = vpop.xlane.xlu0 %192
    %v194 = vrcp.pop 128.0
    %v195 = vmul.f32 128.0, %v194
    %v196 = vsub.f32 1.0, %v195
    %v197 = vmul.f32 %v194, %v196
    %v198 = vadd.f32 %v194, %v197
    %vm199 = vweird.f32 %v194
    %v200 = vsel %vm199, %v194, %v198
    %v201 = vmul.f32 %v193, %v200
    %v202 = vsub.f32 %v190, %v201
    %v203 = vmul.f32 %v202, %v202
    %204 = vadd.xlane.f32.xlu0 %v203
    %v205 = vpop.xlane.xlu0 %204
    %v206 = vmul.f32 %v205, %v200
    %v207 = vadd.f32 %v206, 1e-05
    %v208 = vrsqrt.pop %v207
    %v209 = vmul.f32 %v208, %v207
    %v210 = vmul.f32 %v209, %v208
    %v211 = vmul.f32 0.5, %v210
    %v212 = vsub.f32 1.5, %v211
    %v213 = vmul.f32 %v208, %v212
    %vm214 = vweird.f32 %v207
    %vm215 = vweird.f32 %v208
    %vm216 = vmor %vm214, %vm215
    %v217 = vsel %vm216, %v208, %v213
    %v218 = vmul.f32 %v202, %v217
    %v219 = vperm.slane %v167, 1
    %v220 = vmul.f32 %v218, %v219
    %v221 = vperm.slane %v167, 2
    %v222 = vadd.f32 %v220, %v221
    %v223 = vtanh.pop %v222
    %224 = vst [vmem:[#allocation11] sm:$0xff] %v223
    // Predicated region
    $region42: #{tpu_custom_call.1} parent=1 // pred_check
      _
    $region43: #{tpu_custom_call.1} parent=1 // pred_check_branch
      %226 = sbr.rel (0) target = $region45
    $region44: #{tpu_custom_call.1} parent=1 // pred_region
      %228 = vsyncadd [#allocation4], 0
      %s230 = sshll.u32 [#allocation11], 4
      %s231 = int_to_ptr.vmem [resolvable:$true] %s230
      %s232 = sshll.u32 %s5, 4
      %s233 = int_to_ptr.hbm [resolvable:$true] %s232
      %235 = dma.vmem_to_hbm [thread:$0]  %s231, 128, %s233, [#allocation4]
    $region45: #{tpu_custom_call.1} parent=1 // pred_fallthru
      _
    // Predicated region
    $region46: #{tpu_custom_call.1} parent=1 // pred_check
      _
    $region47: #{tpu_custom_call.1} parent=1 // pred_check_branch
      %237 = sbr.rel (0) target = $region49
    $region48: #{tpu_custom_call.1} parent=1 // pred_region
      %239 = dma.done [#allocation4], 128
    $region49: #{tpu_custom_call.1} parent=1 // pred_fallthru
      _
    %240 = vsyncpa [#allocation3], 1
    %241 = vsyncpa [#allocation6], 1
    %242 = vsyncpa [#allocation9], 1
    %243 = vsyncpa [#allocation4], 1

</llo_original>
